<compile_context>
chip_gen: v7x
topology: tpu7x:2x2x1
jax: 0.10.0
libtpu: 0.0.40
codegen_flags: <defaults>
</compile_context>

<pallas_src>
import functools

import jax
import jax.numpy as jnp
from jax import lax
from jax.experimental import pallas as pl
from jax.experimental.pallas import tpu as pltpu


def decoder_kernel(edge_ref, *refs, num_z_parts):
    """One E-tile of the inner-product decoder.

    edge_ref : (1, 2*TE) int32   [src ids | dst ids] for this tile (lane-dense)
    refs[:num_z_parts] : (N, D)  z operand(s): f32, or bf16 hi (+ bf16 lo),
                                 resident in VMEM across tiles
    refs[num_z_parts]  : (1, TE) f32 output row sigmoid(<z_src, z_dst>)
    """
    z_refs = refs[:num_z_parts]
    out_ref = refs[num_z_parts]

    edges = edge_ref[...]                                      # (1, 2*TE)
    te = edges.shape[1] // 2
    n = z_refs[0].shape[0]
    mat_dtype = z_refs[0].dtype

    # Single fused one-hot for both endpoints: oh[v, e] == 1 iff lane e of the
    # [src | dst] slab names node v.  The (N, 1) iota broadcasts against the
    # edge row -- no (N, TE) iota is materialized per tile.
    iota_n = lax.broadcasted_iota(jnp.int32, (n, 1), 0)        # (N, 1)
    oh = (edges == iota_n).astype(mat_dtype)                   # (N, 2*TE)

    # One MXU gather for src+dst together, contracting N:
    #   (N, D)^T @ (N, 2*TE) -> (D, 2*TE), f32 accumulation.
    # With the hi/lo split, a second accumulated matmul recovers ~f32 accuracy
    # (the one-hot is exact, so gather(hi) + gather(lo) == gather(hi + lo)).
    dn = (((0,), (0,)), ((), ()))
    g = lax.dot_general(z_refs[0][...], oh, dimension_numbers=dn,
                        preferred_element_type=jnp.float32)    # (D, 2*TE)
    for zr in z_refs[1:]:
        g = g + lax.dot_general(zr[...], oh, dimension_numbers=dn,
                                preferred_element_type=jnp.float32)

    # Free lane split at the TE boundary (TE is a multiple of 128).
    z_src = g[:, :te]                                          # (D, TE)
    z_dst = g[:, te:]                                          # (D, TE)

    # Per-edge inner product: reduce D (sublane axis) -> lane-dense (1, TE).
    val = jnp.sum(z_src * z_dst, axis=0, keepdims=True)
    out_ref[...] = jax.nn.sigmoid(val).astype(out_ref.dtype)


def _vmem_capacity_bytes():
    """Physical VMEM per TensorCore; conservative (v7x) fallback if unknown."""
    try:
        cap = int(pltpu.get_tpu_info().vmem_capacity_bytes)
        if cap > 0:
            return cap
    except Exception:
        pass
    return 64 * 1024 * 1024


def _pick_tile_e(N, D, E, num_z_parts, mat_bytes, vmem_cap):
    """Edge tile width (multiple of 128).

    Budget for in-kernel intermediates (the (N, 2*TE) fused one-hot, the
    (D, 2*TE) f32 gather, the (D, TE) product) scales with the chip's VMEM
    (~VMEM/8: ~8 MiB on 64 MiB-per-TC v7x, ~16-20 MiB on 128 MiB v5e/v6e),
    minus the resident double-buffered z operand(s).  The grid is kept to
    >= 2 tiles whenever E allows, so both v7x TensorCores receive edge tiles.
    """
    resident_z = 2 * num_z_parts * N * D * mat_bytes           # double-buffered
    budget = min(20 * 1024 * 1024, max(6 * 1024 * 1024, vmem_cap // 8))
    budget = max(budget - resident_z, 2 * 1024 * 1024)

    bytes_per_lane = 2 * N * mat_bytes + 3 * D * 4 + 16
    te = budget // max(bytes_per_lane, 1)
    te_cap = 8192 if vmem_cap > (96 << 20) else 2048           # wide on v5e/v6e
    te = max(128, min(te_cap, (te // 128) * 128))

    e_rounded = pl.cdiv(max(E, 1), 128) * 128
    if e_rounded >= 256:                                       # >= 2 grid steps
        te = min(te, max(128, (e_rounded // 2 // 128) * 128))
    return min(te, e_rounded)


def decoder_forward(z, edge_index, *, mode="bf16_hilo", tile_e=None):
    """z: (N, D) f32, edge_index: (2, E) int -> (E,) f32 sigmoid(<z_s, z_d>).

    mode:
      "bf16_hilo" (default): z fed to the MXU as a bf16 hi+lo split (two
                  accumulated matmuls) -> bf16-MXU speed at ~f32 accuracy.
      "bf16"    : single bf16 operand (fastest; ~1e-2 abs error from z cast).
      "f32"     : exact f32 operands (multi-pass MXU path on v6e/v7x).

    Out-of-range node ids gather a zero embedding -> output 0.5 (PyTorch
    would raise an indexing error).
    """
    N, D = z.shape
    E = edge_index.shape[1]
    z = z.astype(jnp.float32)

    # z operands pre-cast / pre-split ONCE here (hoisted off the per-tile path).
    if mode == "f32":
        z_parts = (z,)
    elif mode == "bf16":
        z_parts = (z.astype(jnp.bfloat16),)
    elif mode == "bf16_hilo":
        z_hi = z.astype(jnp.bfloat16)
        z_lo = (z - z_hi.astype(jnp.float32)).astype(jnp.bfloat16)
        z_parts = (z_hi, z_lo)
    else:
        raise ValueError(f"unknown mode: {mode}")
    mat_bytes = 4 if mode == "f32" else 2

    vmem_cap = _vmem_capacity_bytes()
    if tile_e is None:
        tile_e = _pick_tile_e(N, D, E, len(z_parts), mat_bytes, vmem_cap)
    assert tile_e % 128 == 0

    num_tiles = pl.cdiv(max(E, 1), tile_e)
    e_pad = num_tiles * tile_e

    edges_p = edge_index.astype(jnp.int32)
    if e_pad != E:
        # Padded edge slots gather node 0; their outputs are sliced off below.
        pad = jnp.zeros((2, e_pad - E), dtype=jnp.int32)
        edges_p = jnp.concatenate([edges_p, pad], axis=1)

    # Fused lane-contiguous edge layout: tile i occupies lanes
    # [i*2*TE, (i+1)*2*TE) as [src tile i | dst tile i] -> one lane-dense
    # (1, 2*TE) DMA per grid step instead of a 2-sublane strided read.
    edges_fused = edges_p.reshape(2, num_tiles, tile_e)
    edges_fused = jnp.transpose(edges_fused, (1, 0, 2)).reshape(
        1, num_tiles * 2 * tile_e)

    # VMEM limit scaled to the generation: ~96 MiB on 128 MiB v5e/v6e,
    # ~48 MiB on 64 MiB-per-TC v7x.
    vmem_limit = max(32 * 1024 * 1024,
                     min(vmem_cap * 3 // 4, 96 * 1024 * 1024))

    kernel = functools.partial(decoder_kernel, num_z_parts=len(z_parts))

    in_specs = [pl.BlockSpec((1, 2 * tile_e), lambda i: (0, i))]
    # Full z block(s), constant index_map -> resident in VMEM across tiles.
    in_specs += [pl.BlockSpec((N, D), lambda i: (0, 0)) for _ in z_parts]

    out = pl.pallas_call(
        kernel,
        out_shape=jax.ShapeDtypeStruct((1, e_pad), jnp.float32),
        grid=(num_tiles,),
        in_specs=in_specs,
        out_specs=pl.BlockSpec((1, tile_e), lambda i: (0, i)),
        compiler_params=pltpu.CompilerParams(
            dimension_semantics=("parallel",),   # edge tiles are independent
            vmem_limit_bytes=int(vmem_limit),
        ),
    )(edges_fused, *z_parts)
    return out[0, :E]


def decoder_reference(z, edge_index):
    # Pure-JAX reference mirroring the PyTorch forward exactly.
    value = jnp.sum(z[edge_index[0]] * z[edge_index[1]], axis=1)
    return jax.nn.sigmoid(value)


if __name__ == "__main__":
    key = jax.random.PRNGKey(0)
    k_z1, k_e1, k_z2, k_e2 = jax.random.split(key, 4)

    # --- Test 1: the module's toy size (single tile). ---
    N, D, E = 16, 32, 24
    z = jax.random.normal(k_z1, (N, D), dtype=jnp.float32)
    edge_index = jax.random.randint(k_e1, (2, E), 0, N, dtype=jnp.int32)
    ref = decoder_reference(z, edge_index)

    out = jax.block_until_ready(decoder_forward(z, edge_index, mode="f32"))
    assert out.shape == (E,)
    assert jnp.allclose(out, ref, atol=1e-5, rtol=1e-5)

    # Default bf16 hi/lo path on the same data: ~f32 accuracy at bf16 speed.
    out_hl = jax.block_until_ready(decoder_forward(z, edge_index))
    assert jnp.allclose(out_hl, ref, atol=2e-3, rtol=2e-3)

    # --- Test 2: multi-tile grid (E spans several 128-lane tiles). ---
    N2, D2, E2 = 64, 32, 300
    z2 = jax.random.normal(k_z2, (N2, D2), dtype=jnp.float32)
    edge_index2 = jax.random.randint(k_e2, (2, E2), 0, N2, dtype=jnp.int32)
    ref2 = decoder_reference(z2, edge_index2)

    out2 = jax.block_until_ready(
        decoder_forward(z2, edge_index2, mode="f32", tile_e=128))
    assert out2.shape == (E2,)
    assert jnp.allclose(out2, ref2, atol=1e-5, rtol=1e-5)

    out2_hl = jax.block_until_ready(decoder_forward(z2, edge_index2))
    assert jnp.allclose(out2_hl, ref2, atol=2e-3, rtol=2e-3)

    # --- Test 3: fastest single-operand bf16 path (looser tolerance). ---
    out2_bf = jax.block_until_ready(
        decoder_forward(z2, edge_index2, mode="bf16", tile_e=256))
    assert jnp.allclose(out2_bf, ref2, atol=2.5e-2, rtol=2.5e-2)

    print("KERNEL_OK")
</pallas_src>

<mosaic_0001>
module attributes {stable_mosaic.version = 11 : i64} {
  func.func @decoder_kernel(%arg0: i32, %arg1: memref<1x256xi32, #tpu.memory_space<vmem>>, %arg2: memref<16x32xf32, #tpu.memory_space<vmem>>, %arg3: memref<1x128xf32, #tpu.memory_space<vmem>>) attributes {dimension_semantics = [#tpu.dimension_semantics<parallel>], iteration_bounds = array<i64: 1>, scalar_prefetch = 0 : i64, scratch_operands = 0 : i64, tpu.core_type = #tpu.core_type<tc>, window_params = [{transform_indices = @transform_0, window_bounds = array<i64: 1, 256>}, {pipeline_mode = #tpu.pipeline_mode<synchronous>, transform_indices = @transform_1, window_bounds = array<i64: 16, 32>}, {transform_indices = @transform_2, window_bounds = array<i64: 1, 128>}]} {
    %c0 = arith.constant 0 : index
    %c0_0 = arith.constant 0 : index
    %0 = vector.load %arg1[%c0, %c0_0] : memref<1x256xi32, #tpu.memory_space<vmem>>, vector<1x256xi32>
    %1 = tpu.iota {dimensions = array<i32: 0>} : vector<16x1xi32>
    %2 = vector.broadcast %0 : vector<1x256xi32> to vector<16x256xi32>
    %3 = vector.broadcast %1 : vector<16x1xi32> to vector<16x256xi32>
    %4 = arith.cmpi eq, %2, %3 : vector<16x256xi32>
    %5 = arith.extui %4 : vector<16x256xi1> to vector<16x256xi32>
    %6 = arith.sitofp %5 : vector<16x256xi32> to vector<16x256xf32>
    %c0_1 = arith.constant 0 : index
    %c0_2 = arith.constant 0 : index
    %7 = vector.load %arg2[%c0_1, %c0_2] : memref<16x32xf32, #tpu.memory_space<vmem>>, vector<16x32xf32>
    %cst = arith.constant dense<0.000000e+00> : vector<32x256xf32>
    %8 = tpu.matmul %7, %6, %cst {dimension_numbers = #tpu.dot_dimension_numbers<[0], [0], [1], [1], [0, 1, 1, 1], [], []>} : vector<16x32xf32>, vector<16x256xf32>, vector<32x256xf32> -> vector<32x256xf32>
    %9 = vector.extract_strided_slice %8 {offsets = [0, 0], sizes = [32, 128], strides = [1, 1]} : vector<32x256xf32> to vector<32x128xf32>
    %10 = vector.extract_strided_slice %8 {offsets = [0, 128], sizes = [32, 128], strides = [1, 1]} : vector<32x256xf32> to vector<32x128xf32>
    %11 = arith.mulf %9, %10 : vector<32x128xf32>
    %cst_3 = arith.constant dense<0.000000e+00> : vector<128xf32>
    %12 = vector.multi_reduction <add>, %11, %cst_3 [0] : vector<32x128xf32> to vector<128xf32>
    %13 = vector.shape_cast %12 : vector<128xf32> to vector<1x128xf32>
    %14 = arith.negf %13 : vector<1x128xf32>
    %15 = math.exp %14 : vector<1x128xf32>
    %cst_4 = arith.constant 1.000000e+00 : f32
    %16 = vector.broadcast %cst_4 : f32 to vector<1x128xf32>
    %17 = arith.addf %16, %15 : vector<1x128xf32>
    %18 = arith.divf %16, %17 : vector<1x128xf32>
    %c0_5 = arith.constant 0 : index
    %c0_6 = arith.constant 0 : index
    %19 = vector.load %arg3[%c0_5, %c0_6] : memref<1x128xf32, #tpu.memory_space<vmem>>, vector<1x128xf32>
    tpu.vector_store %arg3[%c0_5, %c0_6], %18 {strides = array<i32>} : memref<1x128xf32, #tpu.memory_space<vmem>>, vector<1x128xf32>,
    return
  }
  func.func @transform_0(%arg0: i32) -> (i32, i32) {
    %c0_i32 = arith.constant 0 : i32
    %c0_i32_0 = arith.constant 0 : i32
    return %c0_i32, %arg0 : i32, i32
  }
  func.func @transform_1(%arg0: i32) -> (i32, i32) {
    %c0_i32 = arith.constant 0 : i32
    %c0_i32_0 = arith.constant 0 : i32
    %c0_i32_1 = arith.constant 0 : i32
    return %c0_i32, %c0_i32_0 : i32, i32
  }
  func.func @transform_2(%arg0: i32) -> (i32, i32) {
    %c0_i32 = arith.constant 0 : i32
    %c0_i32_0 = arith.constant 0 : i32
    return %c0_i32, %arg0 : i32, i32
  }
}

</mosaic_0001>

<llo_original>
// kernel: tpu_custom_call.1
$region0: #{tpu_custom_call.1}
  #allocation0 [shape = 'u32[]', space=smem, size = 0x4, offset = 0x4, fixed_abs, tag = 'smem constant byte address 0x4 - core index']
  #allocation1 [shape = 'u32[144,128]{1,0:T(1,128)}', space=vmem, size = 0x12000, scoped, tag = 'internal scratch']
  %s0 = inlined_call_operand.hbm [shape: s32[1,256], index: 0, kind: input, shape index: {}]
  %s1 = inlined_call_operand.hbm [shape: f32[16,32], index: 1, kind: input, shape index: {}]
  %s2 = inlined_call_operand.hbm [shape: f32[1,128], index: 2, kind: output, shape index: {}]
  %s3 = sld [smem:[#allocation0]]
  $region26: #{tpu_custom_call.1} parent=0
    _
  %s5 = ssub.s32 1, %s3
  %s6 = scalar_select 0, %s5, %s3
  $region1: #{tpu_custom_call.1} parent=0
    #allocation2 [shape = 'u8[1024]{0}', space=vmem, size = 0x400, scoped, tag = 'input window, operand 0, single buffered']
    #allocation3 [shape = 's32[1]{0}', space=sflag, size = 0x4, scoped, tag = 'scoped memory for tpu_custom_call.1']
    #allocation4 [shape = 's32[1]{0}', space=sflag, size = 0x4, scoped, tag = 'scoped memory for tpu_custom_call.1']
    #allocation5 [shape = 'u8[8192]{0}', space=vmem, size = 0x2000, scoped, tag = 'input window, operand 1, single buffered']
    #allocation6 [shape = 's32[1]{0}', space=sflag, size = 0x4, scoped, tag = 'scoped memory for tpu_custom_call.1']
    #allocation7 [shape = 'u8[512]{0}', space=vmem, size = 0x400, scoped, tag = 'output window, operand 0, single buffered']
    %7 = vsyncpa [#allocation3], 0
    %8 = vsyncpa [#allocation6], 0
    %9 = vsyncpa [#allocation4], 0
    // Predicated region
    $region2: #{tpu_custom_call.1} parent=1 // pred_check
      _
    $region3: #{tpu_custom_call.1} parent=1 // pred_check_branch
      %11 = sbr.rel (0) target = $region5
    $region4: #{tpu_custom_call.1} parent=1 // pred_region
      %s13 = ssub.s32 32, 32
      %14 = vsyncadd [#allocation3], %s13
      %s16 = sshll.u32 [#allocation2], 4
      %s17 = int_to_ptr.vmem [resolvable:$true] %s16
      %19 = dma.hbm_to_vmem [thread:$0]  %s0, 32, %s17, [#allocation3]
    $region5: #{tpu_custom_call.1} parent=1 // pred_fallthru
      _
    // Predicated region
    $region6: #{tpu_custom_call.1} parent=1 // pred_check
      _
    $region7: #{tpu_custom_call.1} parent=1 // pred_check_branch
      %21 = sbr.rel (0) target = $region9
    $region8: #{tpu_custom_call.1} parent=1 // pred_region
      %s23 = ssub.s32 256, 256
      %24 = vsyncadd [#allocation6], %s23
      %s25 = sshll.u32 [#allocation5], 4
      %s26 = int_to_ptr.vmem [resolvable:$true] %s25
      %31 = dma.hbm_to_vmem [thread:$0]  %s1, 256, %s26, [#allocation6], 128, 128, 8
    $region9: #{tpu_custom_call.1} parent=1 // pred_fallthru
      _
    // Predicated region
    $region10: #{tpu_custom_call.1} parent=1 // pred_check
      _
    $region11: #{tpu_custom_call.1} parent=1 // pred_check_branch
      %33 = sbr.rel (0) target = $region13
    $region12: #{tpu_custom_call.1} parent=1 // pred_region
      %34 = dma.done [#allocation3], 32
    $region13: #{tpu_custom_call.1} parent=1 // pred_fallthru
      _
    // Predicated region
    $region14: #{tpu_custom_call.1} parent=1 // pred_check
      _
    $region15: #{tpu_custom_call.1} parent=1 // pred_check_branch
      %36 = sbr.rel (0) target = $region17
    $region16: #{tpu_custom_call.1} parent=1 // pred_region
      %37 = dma.done [#allocation6], 256
    $region17: #{tpu_custom_call.1} parent=1 // pred_fallthru
      _
    %v38 = vld [vmem:[#allocation2] sm:$0x3]
    %v39 = vlaneseq
    %v40 = vshrl.u32 %v39, 7
    %v41 = vadd.s32 %v40, 8
    %v42 = vlaneseq
    %v43 = vshrl.u32 %v42, 7
    %v44 = vsub.s32 0, %v43
    %v45 = vrot.slane %v38, %v44
    %v46 = vlaneseq
    %v47 = vshrl.u32 %v46, 7
    %v48 = vsub.s32 1, %v47
    %v49 = vrot.slane %v38, %v48
    %vm50 = vcmp.eq.s32.totalorder %v45, %v40
    %vm51 = vcmp.eq.s32.totalorder %v49, %v40
    %vm52 = vcmp.eq.s32.totalorder %v45, %v41
    %vm53 = vcmp.eq.s32.totalorder %v49, %v41
    %v54 = vsel %vm50, 1, 0
    %v55 = vsel %vm51, 1, 0
    %v56 = vsel %vm52, 1, 0
    %v57 = vsel %vm53, 1, 0
    %v58 = vcvt.s32.f32 %v54
    %v59 = vcvt.s32.f32 %v55
    %v60 = vcvt.s32.f32 %v56
    %v61 = vcvt.s32.f32 %v57
    %v62 = vld [vmem:[#allocation5] sm:$0xff]
    %v63 = vld [vmem:[#allocation5 + $0x8] sm:$0xff]
    %64 = vxpose.xlu0.b32.start [1/16] %v62, 128
    %65 = vxpose.xlu0.b32.cont [2/16] %v63, 128
    %66 = vxpose.xlu0.b32.cont [3/16] 0.0, 128
    %67 = vxpose.xlu0.b32.cont [4/16] 0.0, 128
    %68 = vxpose.xlu0.b32.cont [5/16] 0.0, 128
    %69 = vxpose.xlu0.b32.cont [6/16] 0.0, 128
    %70 = vxpose.xlu0.b32.cont [7/16] 0.0, 128
    %71 = vxpose.xlu0.b32.cont [8/16] 0.0, 128
    %72 = vxpose.xlu0.b32.cont [9/16] 0.0, 128
    %73 = vxpose.xlu0.b32.cont [10/16] 0.0, 128
    %74 = vxpose.xlu0.b32.cont [11/16] 0.0, 128
    %75 = vxpose.xlu0.b32.cont [12/16] 0.0, 128
    %76 = vxpose.xlu0.b32.cont [13/16] 0.0, 128
    %77 = vxpose.xlu0.b32.cont [14/16] 0.0, 128
    %78 = vxpose.xlu0.b32.cont [15/16] 0.0, 128
    %79 = vxpose.xlu0.b32.end [16/16] 0.0, 128
    %v80 = vpop.trf.xlu0
    %v81 = vpop.trf.xlu0
    %v82 = vpop.trf.xlu0
    %v83 = vpop.trf.xlu0
    %v84 = vpop.trf.xlu0
    %v85 = vpop.trf.xlu0
    %v86 = vpop.trf.xlu0
    %v87 = vpop.trf.xlu0
    %v88 = vpop.trf.xlu0
    %v89 = vpop.trf.xlu0
    %v90 = vpop.trf.xlu0
    %v91 = vpop.trf.xlu0
    %v92 = vpop.trf.xlu0
    %v93 = vpop.trf.xlu0
    %v94 = vpop.trf.xlu0
    %v95 = vpop.trf.xlu0
    %vm96 = vcmask 130048
    %v98 = vsel %vm96, %v80, 0
    %v101 = vsel %vm96, %v81, 0
    %v104 = vsel %vm96, %v82, 0
    %v107 = vsel %vm96, %v83, 0
    %109 = vmatprep.subr.mxu0 %v59
    %110 = vmatpush1.msra.mxu0 %v58
    %111 = vmatprep.subr.mxu0 %v61
    %112 = vmatpush1.msra.mxu0 %v60
    %113 = vmatprep.subr.mxu0 0.0
    %114 = vmatpush1.msra.mxu0 0.0
    %115 = vmatprep.subr.mxu0 0.0
    %116 = vmatpush1.msra.mxu0 0.0
    %117 = vmatprep.subr.mxu0 0.0
    %118 = vmatpush1.msra.mxu0 0.0
    %119 = vmatprep.subr.mxu0 0.0
    %120 = vmatpush1.msra.mxu0 0.0
    %121 = vmatprep.subr.mxu0 0.0
    %122 = vmatpush1.msra.mxu0 0.0
    %123 = vmatprep.subr.mxu0 0.0
    %124 = vmatpush1.msra.mxu0 0.0
    %125 = vmatprep.subr.mxu0 0.0
    %126 = vmatpush1.msra.mxu0 0.0
    %127 = vmatprep.subr.mxu0 0.0
    %128 = vmatpush1.msra.mxu0 0.0
    %129 = vmatprep.subr.mxu0 0.0
    %130 = vmatpush1.msra.mxu0 0.0
    %131 = vmatprep.subr.mxu0 0.0
    %132 = vmatpush1.msra.mxu0 0.0
    %133 = vmatprep.subr.mxu0 0.0
    %134 = vmatpush1.msra.mxu0 0.0
    %135 = vmatprep.subr.mxu0 0.0
    %136 = vmatpush1.msra.mxu0 0.0
    %137 = vmatprep.subr.mxu0 0.0
    %138 = vmatpush1.msra.mxu0 0.0
    %139 = vmatprep.subr.mxu0 0.0
    %140 = vmatpush1.msra.mxu0 0.0
    %141 = vmatprep.subr.mxu0 0.0
    %142 = vmatpush1.msra.mxu0 0.0
    %143 = vmatprep.subr.mxu0 0.0
    %144 = vmatpush1.msra.mxu0 0.0
    %145 = vmatprep.subr.mxu0 0.0
    %146 = vmatpush1.msra.mxu0 0.0
    %147 = vmatprep.subr.mxu0 0.0
    %148 = vmatpush1.msra.mxu0 0.0
    %149 = vmatprep.subr.mxu0 0.0
    %150 = vmatpush1.msra.mxu0 0.0
    %151 = vmatprep.subr.mxu0 0.0
    %152 = vmatpush1.msra.mxu0 0.0
    %153 = vmatprep.subr.mxu0 0.0
    %154 = vmatpush1.msra.mxu0 0.0
    %155 = vmatprep.subr.mxu0 0.0
    %156 = vmatpush1.msra.mxu0 0.0
    %157 = vmatprep.subr.mxu0 0.0
    %158 = vmatpush1.msra.mxu0 0.0
    %159 = vmatprep.subr.mxu0 0.0
    %160 = vmatpush1.msra.mxu0 0.0
    %161 = vmatprep.subr.mxu0 0.0
    %162 = vmatpush1.msra.mxu0 0.0
    %163 = vmatprep.subr.mxu0 0.0
    %164 = vmatpush1.msra.mxu0 0.0
    %165 = vmatprep.subr.mxu0 0.0
    %166 = vmatpush1.msra.mxu0 0.0
    %167 = vmatprep.subr.mxu0 0.0
    %168 = vmatpush1.msra.mxu0 0.0
    %169 = vmatprep.subr.mxu0 0.0
    %170 = vmatpush1.msra.mxu0 0.0
    %171 = vmatprep.subr.mxu0 0.0
    %172 = vmatpush1.msra.mxu0 0.0
    %173 = vmatprep.mubr.f32.mxu0 0.0
    %174 = vmatmul.mubr.f32.gmra.mrb[0].mxu0 %v98
    %v175 = vpop.f32.mrb[0].mxu0
    %v176 = vadd.f32 0.0, %v175
    %v177 = vpop.f32.mrb[0].mxu0
    %v178 = vadd.f32 0.0, %v177
    %179 = vmatprep.mubr.f32.mxu0 0.0
    %180 = vmatmul.mubr.f32.gmra.mrb[0].mxu0 %v101
    %v181 = vpop.f32.mrb[0].mxu0
    %v182 = vadd.f32 0.0, %v181
    %v183 = vpop.f32.mrb[0].mxu0
    %v184 = vadd.f32 0.0, %v183
    %185 = vmatprep.mubr.f32.mxu0 0.0
    %186 = vmatmul.mubr.f32.gmra.mrb[0].mxu0 %v104
    %v187 = vpop.f32.mrb[0].mxu0
    %v188 = vadd.f32 0.0, %v187
    %v189 = vpop.f32.mrb[0].mxu0
    %v190 = vadd.f32 0.0, %v189
    %191 = vmatprep.mubr.f32.mxu0 0.0
    %192 = vmatmul.mubr.f32.gmra.mrb[0].mxu0 %v107
    %v193 = vpop.f32.mrb[0].mxu0
    %v194 = vadd.f32 0.0, %v193
    %v195 = vpop.f32.mrb[0].mxu0
    %v196 = vadd.f32 0.0, %v195
    %197 = vdwg.mxu0
    %v198 = vmul.f32 %v176, %v178
    %v199 = vmul.f32 %v182, %v184
    %v200 = vmul.f32 %v188, %v190
    %v201 = vmul.f32 %v194, %v196
    %v202 = vadd.f32 %v198, %v199
    %v203 = vadd.f32 %v202, %v200
    %v204 = vadd.f32 %v203, %v201
    %v205 = vrot.slane %v204, 4
    %v206 = vadd.f32 %v204, %v205
    %v207 = vrot.slane %v206, 2
    %v208 = vadd.f32 %v206, %v207
    %v209 = vrot.slane %v208, 1
    %v210 = vadd.f32 %v208, %v209
    %v211 = vxor.u32 %v210, 2147483648
    %v212 = vmul.f32 %v211, 1.442695
    %v213 = vpow.pop %v212
    %v214 = vadd.f32 %v213, 1.0
    %v215 = vrcp.pop %v214
    %v216 = vmul.f32 1.0, %v215
    %217 = vst [vmem:[#allocation7] sm:$0x1] %v216
    // Predicated region
    $region18: #{tpu_custom_call.1} parent=1 // pred_check
      _
    $region19: #{tpu_custom_call.1} parent=1 // pred_check_branch
      %219 = sbr.rel (0) target = $region21
    $region20: #{tpu_custom_call.1} parent=1 // pred_region
      %s221 = ssub.s32 16, 16
      %222 = vsyncadd [#allocation4], %s221
      %s224 = sshll.u32 [#allocation7], 4
      %s225 = int_to_ptr.vmem [resolvable:$true] %s224
      %227 = dma.vmem_to_hbm [thread:$0]  %s225, 16, %s2, [#allocation4]
    $region21: #{tpu_custom_call.1} parent=1 // pred_fallthru
      _
    // Predicated region
    $region22: #{tpu_custom_call.1} parent=1 // pred_check
      _
    $region23: #{tpu_custom_call.1} parent=1 // pred_check_branch
      %229 = sbr.rel (0) target = $region25
    $region24: #{tpu_custom_call.1} parent=1 // pred_region
      %230 = dma.done [#allocation4], 16
    $region25: #{tpu_custom_call.1} parent=1 // pred_fallthru
      _
    %231 = vsyncpa [#allocation3], 1
    %232 = vsyncpa [#allocation6], 1
    %233 = vsyncpa [#allocation4], 1

</llo_original>
